<compile_context>
chip_gen: v6e
topology: v6e:2x2x1
jax: 0.10.0
libtpu: 0.0.40
codegen_flags: <defaults>
</compile_context>

<pallas_src>
import functools

import jax
import jax.numpy as jnp
from jax.experimental import pallas as pl
from jax.experimental.pallas import tpu as pltpu

LANE = 128      # TPU lane width: pad feature dims to this
TILE_B = 128    # batch rows per grid step (2 steps at batch=256 -> both v7x TCs busy)
SUBLANE = 8     # f32 sublane multiple (bias stack padded to this many rows)


def _round_up(n, m):
    return ((n + m - 1) // m) * m


# ---------------------------------------------------------------------------
# Kernel: fused 5-layer MLP forward for one (TILE_B, F) batch tile.
# x_ref: (TILE_B, F) bf16, w_ref: (L, F, F) bf16, b_ref: (L_pad, F) f32,
# o_ref: (TILE_B, F) bf16.  All parameter refs are VMEM-resident (same block
# index every grid step).
# ---------------------------------------------------------------------------
def generator_kernel(x_ref, w_ref, b_ref, o_ref, *, num_layers):
    h = x_ref[...]
    for l in range(num_layers):
        # bf16 matmul on the MXU, f32 accumulate, f32 bias add, VPU ReLU.
        acc = jnp.dot(h, w_ref[l], preferred_element_type=jnp.float32)
        acc = acc + b_ref[l:l + 1, :]
        h = jnp.maximum(acc, 0.0).astype(jnp.bfloat16)
    o_ref[...] = h.astype(o_ref.dtype)


# ---------------------------------------------------------------------------
# One-time parameter preparation (hoisted out of the per-call path).
# params: list of (W, b) with W shape (in, out) f32, b shape (1, out) f32.
# Returns (w_stacked bf16 (L, F, F), b_stacked f32 (L_pad, F)).
# ---------------------------------------------------------------------------
def prepare_generator_params(params):
    dims = [params[0][0].shape[0]] + [w.shape[1] for w, _ in params]
    feat = max(_round_up(d, LANE) for d in dims)           # uniform padded width
    num_layers = len(params)
    l_pad = _round_up(num_layers, SUBLANE)

    w_stacked = jnp.zeros((num_layers, feat, feat), jnp.bfloat16)
    b_stacked = jnp.zeros((l_pad, feat), jnp.float32)
    for li, (w, b) in enumerate(params):
        fin, fout = w.shape
        w_stacked = w_stacked.at[li, :fin, :fout].set(w.astype(jnp.bfloat16))
        b_stacked = b_stacked.at[li, :fout].set(b.reshape(-1).astype(jnp.float32))
    return w_stacked, b_stacked


# ---------------------------------------------------------------------------
# Hot-path forward: pads x, runs the fused kernel, slices + upcasts the output.
# ---------------------------------------------------------------------------
def generator_forward(x, w_stacked, b_stacked, *, out_size):
    batch, in_size = x.shape
    num_layers, feat, _ = w_stacked.shape
    batch_p = _round_up(batch, TILE_B)

    # Single pad of the activations (zeros in padded lanes keep the math exact).
    x_p = jnp.pad(x.astype(jnp.bfloat16),
                  ((0, batch_p - batch), (0, feat - in_size)))

    grid = (batch_p // TILE_B,)

    flops = 2 * batch_p * num_layers * feat * feat
    bytes_accessed = (x_p.size * x_p.dtype.itemsize
                      + w_stacked.size * w_stacked.dtype.itemsize
                      + b_stacked.size * b_stacked.dtype.itemsize
                      + batch_p * feat * 2)                 # bf16 output

    out_p = pl.pallas_call(
        functools.partial(generator_kernel, num_layers=num_layers),
        out_shape=jax.ShapeDtypeStruct((batch_p, feat), jnp.bfloat16),
        grid=grid,
        in_specs=[
            # x: tiled along batch, double-buffered by the pipeline.
            pl.BlockSpec((TILE_B, feat), lambda i: (i, 0)),
            # stacked weights / biases: full-array blocks, same index every step
            # -> VMEM-resident across the whole grid.
            pl.BlockSpec((num_layers, feat, feat), lambda i: (0, 0, 0)),
            pl.BlockSpec((b_stacked.shape[0], feat), lambda i: (0, 0)),
        ],
        out_specs=pl.BlockSpec((TILE_B, feat), lambda i: (i, 0)),
        compiler_params=pltpu.CompilerParams(
            dimension_semantics=("parallel",)),
        cost_estimate=pl.CostEstimate(
            flops=flops, transcendentals=0, bytes_accessed=bytes_accessed),
    )(x_p, w_stacked, b_stacked)

    # Slice away batch/feature padding and upcast once, outside the kernel.
    return out_p[:batch, :out_size].astype(jnp.float32)


# ---------------------------------------------------------------------------
# Init / reference (PyTorch nn.Linear-compatible shapes; W stored as (in, out)).
# ---------------------------------------------------------------------------
def init_generator_params(key, input_size, hidden_sizes, output_size):
    sizes = [input_size] + list(hidden_sizes) + [output_size]
    params = []
    for i in range(len(sizes) - 1):
        fan_in, fan_out = sizes[i], sizes[i + 1]
        key, wk, bk = jax.random.split(key, 3)
        bound = 1.0 / jnp.sqrt(jnp.float32(fan_in))
        w = jax.random.uniform(wk, (fan_in, fan_out), jnp.float32, -bound, bound)
        b = jax.random.uniform(bk, (1, fan_out), jnp.float32, -bound, bound)
        params.append((w, b))
    return params


def reference_forward(x, params):
    h = x
    for w, b in params:
        h = jnp.maximum(h @ w + b, 0.0)
    return h


if __name__ == "__main__":
    key = jax.random.PRNGKey(0)

    batch = 256              # two 128-row grid steps (feeds both v7x TensorCores)
    input_size = 16
    hidden_sizes = [32, 64, 64, 32]
    output_size = 16

    key, xk = jax.random.split(key)
    x = jax.random.normal(xk, (batch, input_size), jnp.float32)

    params = init_generator_params(key, input_size, hidden_sizes, output_size)

    # One-time padding / casting / stacking (NOT in the per-call path).
    w_stacked, b_stacked = prepare_generator_params(params)

    fwd = jax.jit(functools.partial(generator_forward, out_size=output_size))
    out = jax.block_until_ready(fwd(x, w_stacked, b_stacked))

    ref = reference_forward(x, params)
    assert out.shape == (batch, output_size)
    # bf16 operands/output with f32 accumulation -> loosened tolerance vs. f32 ref.
    max_err = float(jnp.max(jnp.abs(out - ref)))
    assert jnp.allclose(out, ref, atol=5e-2, rtol=5e-2), f"max abs err {max_err}"

    print("KERNEL_OK")
</pallas_src>

<mosaic_0001>
module attributes {stable_mosaic.version = 11 : i64} {
  func.func @generator_kernel(%arg0: i32, %arg1: memref<128x128xbf16, #tpu.memory_space<vmem>>, %arg2: memref<5x128x128xbf16, #tpu.memory_space<vmem>>, %arg3: memref<8x128xf32, #tpu.memory_space<vmem>>, %arg4: memref<128x128xbf16, #tpu.memory_space<vmem>>) attributes {dimension_semantics = [#tpu.dimension_semantics<parallel>], iteration_bounds = array<i64: 2>, scalar_prefetch = 0 : i64, scratch_operands = 0 : i64, tpu.core_type = #tpu.core_type<tc>, window_params = [{transform_indices = @transform_0, window_bounds = array<i64: 128, 128>}, {pipeline_mode = #tpu.pipeline_mode<synchronous>, transform_indices = @transform_1, window_bounds = array<i64: 5, 128, 128>}, {pipeline_mode = #tpu.pipeline_mode<synchronous>, transform_indices = @transform_2, window_bounds = array<i64: 8, 128>}, {transform_indices = @transform_3, window_bounds = array<i64: 128, 128>}]} {
    %c0 = arith.constant 0 : index
    %c0_0 = arith.constant 0 : index
    %0 = vector.load %arg1[%c0, %c0_0] : memref<128x128xbf16, #tpu.memory_space<vmem>>, vector<128x128xbf16>
    %c0_1 = arith.constant 0 : index
    %c0_2 = arith.constant 0 : index
    %c0_3 = arith.constant 0 : index
    %1 = vector.load %arg2[%c0_1, %c0_2, %c0_3] : memref<5x128x128xbf16, #tpu.memory_space<vmem>>, vector<1x128x128xbf16>
    %2 = vector.shape_cast %1 : vector<1x128x128xbf16> to vector<128x128xbf16>
    %cst = arith.constant dense<0.000000e+00> : vector<128x128xf32>
    %3 = tpu.matmul %0, %2, %cst {dimension_numbers = #tpu.dot_dimension_numbers<[1], [0], [0], [1], [0, 0, 1, 1], [], []>} : vector<128x128xbf16>, vector<128x128xbf16>, vector<128x128xf32> -> vector<128x128xf32>
    %c0_4 = arith.constant 0 : index
    %c0_5 = arith.constant 0 : index
    %4 = vector.load %arg3[%c0_4, %c0_5] : memref<8x128xf32, #tpu.memory_space<vmem>>, vector<1x128xf32>
    %5 = vector.broadcast %4 : vector<1x128xf32> to vector<128x128xf32>
    %6 = arith.addf %3, %5 : vector<128x128xf32>
    %cst_6 = arith.constant 0.000000e+00 : f32
    %7 = vector.broadcast %cst_6 : f32 to vector<128x128xf32>
    %8 = arith.maximumf %6, %7 : vector<128x128xf32>
    %9 = arith.truncf %8 : vector<128x128xf32> to vector<128x128xbf16>
    %c1 = arith.constant 1 : index
    %c0_7 = arith.constant 0 : index
    %c0_8 = arith.constant 0 : index
    %10 = vector.load %arg2[%c1, %c0_7, %c0_8] : memref<5x128x128xbf16, #tpu.memory_space<vmem>>, vector<1x128x128xbf16>
    %11 = vector.shape_cast %10 : vector<1x128x128xbf16> to vector<128x128xbf16>
    %cst_9 = arith.constant dense<0.000000e+00> : vector<128x128xf32>
    %12 = tpu.matmul %9, %11, %cst_9 {dimension_numbers = #tpu.dot_dimension_numbers<[1], [0], [0], [1], [0, 0, 1, 1], [], []>} : vector<128x128xbf16>, vector<128x128xbf16>, vector<128x128xf32> -> vector<128x128xf32>
    %c1_10 = arith.constant 1 : index
    %c0_11 = arith.constant 0 : index
    %13 = vector.load %arg3[%c1_10, %c0_11] : memref<8x128xf32, #tpu.memory_space<vmem>>, vector<1x128xf32>
    %14 = vector.broadcast %13 : vector<1x128xf32> to vector<128x128xf32>
    %15 = arith.addf %12, %14 : vector<128x128xf32>
    %cst_12 = arith.constant 0.000000e+00 : f32
    %16 = vector.broadcast %cst_12 : f32 to vector<128x128xf32>
    %17 = arith.maximumf %15, %16 : vector<128x128xf32>
    %18 = arith.truncf %17 : vector<128x128xf32> to vector<128x128xbf16>
    %c2 = arith.constant 2 : index
    %c0_13 = arith.constant 0 : index
    %c0_14 = arith.constant 0 : index
    %19 = vector.load %arg2[%c2, %c0_13, %c0_14] : memref<5x128x128xbf16, #tpu.memory_space<vmem>>, vector<1x128x128xbf16>
    %20 = vector.shape_cast %19 : vector<1x128x128xbf16> to vector<128x128xbf16>
    %cst_15 = arith.constant dense<0.000000e+00> : vector<128x128xf32>
    %21 = tpu.matmul %18, %20, %cst_15 {dimension_numbers = #tpu.dot_dimension_numbers<[1], [0], [0], [1], [0, 0, 1, 1], [], []>} : vector<128x128xbf16>, vector<128x128xbf16>, vector<128x128xf32> -> vector<128x128xf32>
    %c2_16 = arith.constant 2 : index
    %c0_17 = arith.constant 0 : index
    %22 = vector.load %arg3[%c2_16, %c0_17] : memref<8x128xf32, #tpu.memory_space<vmem>>, vector<1x128xf32>
    %23 = vector.broadcast %22 : vector<1x128xf32> to vector<128x128xf32>
    %24 = arith.addf %21, %23 : vector<128x128xf32>
    %cst_18 = arith.constant 0.000000e+00 : f32
    %25 = vector.broadcast %cst_18 : f32 to vector<128x128xf32>
    %26 = arith.maximumf %24, %25 : vector<128x128xf32>
    %27 = arith.truncf %26 : vector<128x128xf32> to vector<128x128xbf16>
    %c3 = arith.constant 3 : index
    %c0_19 = arith.constant 0 : index
    %c0_20 = arith.constant 0 : index
    %28 = vector.load %arg2[%c3, %c0_19, %c0_20] : memref<5x128x128xbf16, #tpu.memory_space<vmem>>, vector<1x128x128xbf16>
    %29 = vector.shape_cast %28 : vector<1x128x128xbf16> to vector<128x128xbf16>
    %cst_21 = arith.constant dense<0.000000e+00> : vector<128x128xf32>
    %30 = tpu.matmul %27, %29, %cst_21 {dimension_numbers = #tpu.dot_dimension_numbers<[1], [0], [0], [1], [0, 0, 1, 1], [], []>} : vector<128x128xbf16>, vector<128x128xbf16>, vector<128x128xf32> -> vector<128x128xf32>
    %c3_22 = arith.constant 3 : index
    %c0_23 = arith.constant 0 : index
    %31 = vector.load %arg3[%c3_22, %c0_23] : memref<8x128xf32, #tpu.memory_space<vmem>>, vector<1x128xf32>
    %32 = vector.broadcast %31 : vector<1x128xf32> to vector<128x128xf32>
    %33 = arith.addf %30, %32 : vector<128x128xf32>
    %cst_24 = arith.constant 0.000000e+00 : f32
    %34 = vector.broadcast %cst_24 : f32 to vector<128x128xf32>
    %35 = arith.maximumf %33, %34 : vector<128x128xf32>
    %36 = arith.truncf %35 : vector<128x128xf32> to vector<128x128xbf16>
    %c4 = arith.constant 4 : index
    %c0_25 = arith.constant 0 : index
    %c0_26 = arith.constant 0 : index
    %37 = vector.load %arg2[%c4, %c0_25, %c0_26] : memref<5x128x128xbf16, #tpu.memory_space<vmem>>, vector<1x128x128xbf16>
    %38 = vector.shape_cast %37 : vector<1x128x128xbf16> to vector<128x128xbf16>
    %cst_27 = arith.constant dense<0.000000e+00> : vector<128x128xf32>
    %39 = tpu.matmul %36, %38, %cst_27 {dimension_numbers = #tpu.dot_dimension_numbers<[1], [0], [0], [1], [0, 0, 1, 1], [], []>} : vector<128x128xbf16>, vector<128x128xbf16>, vector<128x128xf32> -> vector<128x128xf32>
    %c4_28 = arith.constant 4 : index
    %c0_29 = arith.constant 0 : index
    %40 = vector.load %arg3[%c4_28, %c0_29] : memref<8x128xf32, #tpu.memory_space<vmem>>, vector<1x128xf32>
    %41 = vector.broadcast %40 : vector<1x128xf32> to vector<128x128xf32>
    %42 = arith.addf %39, %41 : vector<128x128xf32>
    %cst_30 = arith.constant 0.000000e+00 : f32
    %43 = vector.broadcast %cst_30 : f32 to vector<128x128xf32>
    %44 = arith.maximumf %42, %43 : vector<128x128xf32>
    %45 = arith.truncf %44 : vector<128x128xf32> to vector<128x128xbf16>
    %c0_31 = arith.constant 0 : index
    %c0_32 = arith.constant 0 : index
    %46 = vector.load %arg4[%c0_31, %c0_32] : memref<128x128xbf16, #tpu.memory_space<vmem>>, vector<128x128xbf16>
    tpu.vector_store %arg4[%c0_31, %c0_32], %45 {strides = array<i32>} : memref<128x128xbf16, #tpu.memory_space<vmem>>, vector<128x128xbf16>,
    return
  }
  func.func @transform_0(%arg0: i32) -> (i32, i32) {
    %c0_i32 = arith.constant 0 : i32
    %c0_i32_0 = arith.constant 0 : i32
    return %arg0, %c0_i32 : i32, i32
  }
  func.func @transform_1(%arg0: i32) -> (i32, i32, i32) {
    %c0_i32 = arith.constant 0 : i32
    %c0_i32_0 = arith.constant 0 : i32
    %c0_i32_1 = arith.constant 0 : i32
    %c0_i32_2 = arith.constant 0 : i32
    return %c0_i32, %c0_i32_0, %c0_i32_1 : i32, i32, i32
  }
  func.func @transform_2(%arg0: i32) -> (i32, i32) {
    %c0_i32 = arith.constant 0 : i32
    %c0_i32_0 = arith.constant 0 : i32
    %c0_i32_1 = arith.constant 0 : i32
    return %c0_i32, %c0_i32_0 : i32, i32
  }
  func.func @transform_3(%arg0: i32) -> (i32, i32) {
    %c0_i32 = arith.constant 0 : i32
    %c0_i32_0 = arith.constant 0 : i32
    return %arg0, %c0_i32 : i32, i32
  }
}

</mosaic_0001>

<llo_original>
// kernel: generator_forward.1
$region0: #{generator_forward.1}
  #allocation0 [shape = 'u32[]', space=smem, size = 0x4, offset = 0x4, fixed_abs, tag = 'smem constant byte address 0x4 - core index']
  #allocation1 [shape = 'u32[144,128]{1,0:T(1,128)}', space=vmem, size = 0x12000, scoped, tag = 'internal scratch']
  %s0 = inlined_call_operand.vmem [shape: bf16[256,128], index: 0, kind: input, shape index: {}]
  %s1 = inlined_call_operand.vmem [shape: bf16[5,128,128], index: 1, kind: input, shape index: {}]
  %s2 = inlined_call_operand.vmem [shape: f32[8,128], index: 2, kind: input, shape index: {}]
  %s3 = inlined_call_operand.vmem [shape: bf16[256,128], index: 3, kind: output, shape index: {}]
  %s4 = sld [smem:[#allocation0]]
  $region45: #{generator_forward.1} parent=0
    _
  %s6 = ssub.s32 1, %s4
  %s7 = scalar_select 0, %s6, %s4
  loop: start=0, step=1, limit=4
  $region2: #{generator_forward.1} parent=0 // loop_pre_header
    _
  $region3: #{generator_forward.1} parent=0 // loop_header
    %s9 = sphi 0, %s13
    %p10 = scmp.ge.s32.totalorder %s9, 4
    %s19 = sphi 0, %s21
    %s22 = sphi 0, %s19
    %s23 = sphi 0, %s22
    %s39 = sphi 0, %s23
    %s43 = sphi 0, %s43
    %s45 = sphi 0, %s43
    %s46 = sphi 0, %s45
    %s60 = sphi 0, %s46
    %s64 = sphi 0, %s64
    %s66 = sphi 0, %s64
    %s67 = sphi 0, %s66
    %s81 = sphi 0, %s67
    %s87 = sphi 0, %s89
    %s90 = sphi 0, %s87
    %s91 = sphi 0, %s90
    %s107 = sphi 0, %s91
  $region4: #{generator_forward.1} parent=0 // loop_header_branch
    %12 = sbr.rel (%p10) target = $region8
  $region5: #{generator_forward.1} parent=0 // loop_body
    %s14 = ssub.s32 %s9, 1
    %s15 = ssub.s32 %s9, 2
    %s16 = sadd.s32 %s9, 1
    %s17 = ssub.s32 %s9, %s16
    %p18 = scmp.eq.s32.totalorder %s17, 0
    %s20 = sadd.s32 %s19, 1
    %s21 = scalar_select %p18, %s19, %s20
    %p24 = pneg %p18
    %p25 = scmp.eq.s32.totalorder %s9, 1
    %p26 = por %p24, %p25
    %p27 = scmp.ne.s32.totalorder %s19, %s22
    %p28 = scmp.eq.s32.totalorder %s9, 0
    %p29 = por %p27, %p28
    %p30 = scmp.ne.s32.totalorder %s19, %s22
    %p31 = scmp.eq.s32.totalorder %s14, 1
    %p32 = por %p30, %p31
    %p33 = scmp.ne.s32.totalorder %s22, %s23
    %p34 = scmp.eq.s32.totalorder %s14, 0
    %p35 = por %p33, %p34
    %p36 = scmp.ne.s32.totalorder %s22, %s23
    %p37 = scmp.eq.s32.totalorder %s15, 1
    %p38 = por %p36, %p37
    %p40 = scmp.ne.s32.totalorder %s23, %s39
    %p41 = scmp.eq.s32.totalorder %s15, 0
    %p42 = por %p40, %p41
    %s44 = sadd.s32 %s43, 1
    %p47 = scmp.eq.s32.totalorder %s9, 1
    %p48 = scmp.ne.s32.totalorder %s43, %s45
    %p49 = scmp.eq.s32.totalorder %s9, 0
    %p50 = por %p48, %p49
    %p51 = scmp.ne.s32.totalorder %s43, %s45
    %p52 = scmp.eq.s32.totalorder %s14, 1
    %p53 = por %p51, %p52
    %p54 = scmp.ne.s32.totalorder %s45, %s46
    %p55 = scmp.eq.s32.totalorder %s14, 0
    %p56 = por %p54, %p55
    %p57 = scmp.ne.s32.totalorder %s45, %s46
    %p58 = scmp.eq.s32.totalorder %s15, 1
    %p59 = por %p57, %p58
    %p61 = scmp.ne.s32.totalorder %s46, %s60
    %p62 = scmp.eq.s32.totalorder %s15, 0
    %p63 = por %p61, %p62
    %s65 = sadd.s32 %s64, 1
    %p68 = scmp.eq.s32.totalorder %s9, 1
    %p69 = scmp.ne.s32.totalorder %s64, %s66
    %p70 = scmp.eq.s32.totalorder %s9, 0
    %p71 = por %p69, %p70
    %p72 = scmp.ne.s32.totalorder %s64, %s66
    %p73 = scmp.eq.s32.totalorder %s14, 1
    %p74 = por %p72, %p73
    %p75 = scmp.ne.s32.totalorder %s66, %s67
    %p76 = scmp.eq.s32.totalorder %s14, 0
    %p77 = por %p75, %p76
    %p78 = scmp.ne.s32.totalorder %s66, %s67
    %p79 = scmp.eq.s32.totalorder %s15, 1
    %p80 = por %p78, %p79
    %p82 = scmp.ne.s32.totalorder %s67, %s81
    %p83 = scmp.eq.s32.totalorder %s15, 0
    %p84 = por %p82, %p83
    %s85 = ssub.s32 %s9, %s16
    %p86 = scmp.eq.s32.totalorder %s85, 0
    %s88 = sadd.s32 %s87, 1
    %s89 = scalar_select %p86, %s87, %s88
    %p92 = pneg %p86
    %p93 = scmp.eq.s32.totalorder %s9, 1
    %p94 = por %p92, %p93
    %p95 = scmp.ne.s32.totalorder %s87, %s90
    %p96 = scmp.eq.s32.totalorder %s9, 0
    %p97 = por %p95, %p96
    %p98 = scmp.ne.s32.totalorder %s87, %s90
    %p99 = scmp.eq.s32.totalorder %s14, 1
    %p100 = por %p98, %p99
    %p101 = scmp.ne.s32.totalorder %s90, %s91
    %p102 = scmp.eq.s32.totalorder %s14, 0
    %p103 = por %p101, %p102
    %p104 = scmp.ne.s32.totalorder %s90, %s91
    %p105 = scmp.eq.s32.totalorder %s15, 1
    %p106 = por %p104, %p105
    %p108 = scmp.ne.s32.totalorder %s91, %s107
    %p109 = scmp.eq.s32.totalorder %s15, 0
    %p110 = por %p108, %p109
    %p111 = scmp.le.s32.totalorder 1, %s9
    %p112 = scmp.lt.s32.totalorder %s9, 3
    %p113 = pnand %p111, %p112
    %p114 = pneg %p113
    // Predicated region
    $region9: #{generator_forward.1} parent=5 // pred_check
      _
    $region10: #{generator_forward.1} parent=5 // pred_check_branch
      %116 = sbr.rel (%p113) target = $region12
    $region11: #{generator_forward.1} parent=5 // pred_region
      %s117 = ssub.s32 %s9, 1
      // Predicated region
      $region13: #{generator_forward.1} parent=11 // pred_check
        %p118 = pneg %p56
      $region14: #{generator_forward.1} parent=11 // pred_check_branch
        %120 = sbr.rel (%p118) target = $region16
      $region15: #{generator_forward.1} parent=11 // pred_region
        _
      $region16: #{generator_forward.1} parent=11 // pred_fallthru
        _
      // Predicated region
      $region17: #{generator_forward.1} parent=11 // pred_check
        %p121 = pneg %p77
      $region18: #{generator_forward.1} parent=11 // pred_check_branch
        %123 = sbr.rel (%p121) target = $region20
      $region19: #{generator_forward.1} parent=11 // pred_region
        _
      $region20: #{generator_forward.1} parent=11 // pred_fallthru
        _
    $region12: #{generator_forward.1} parent=5 // pred_fallthru
      _
    %p124 = scmp.lt.s32.totalorder %s9, 2
    // Predicated region
    $region21: #{generator_forward.1} parent=5 // pred_check
      %p125 = pneg %p124
    $region22: #{generator_forward.1} parent=5 // pred_check_branch
      %127 = sbr.rel (%p125) target = $region24
    $region23: #{generator_forward.1} parent=5 // pred_region
      // Predicated region
      $region25: #{generator_forward.1} parent=23 // pred_check
        %p128 = pneg %p29
      $region26: #{generator_forward.1} parent=23 // pred_check_branch
        %130 = sbr.rel (%p128) target = $region28
      $region27: #{generator_forward.1} parent=23 // pred_region
        %s131 = smul.u32 16, %s9
        %p132 = scmp.lt.s32.totalorder %s131, 31
        %s133 = scalar_select %p132, %s131, 31
        %s134 = smul.addr %s133, 4
        %s135 = scalar_lea.vmem %s0, %s134
        %s136 = smul.u32 16, %s9
      $region28: #{generator_forward.1} parent=23 // pred_fallthru
        _
    $region24: #{generator_forward.1} parent=5 // pred_fallthru
      _
    %p137 = scmp.le.s32.totalorder 1, %s9
    %p138 = scmp.lt.s32.totalorder %s9, 3
    %p139 = pnand %p137, %p138
    %p140 = pneg %p139
    // Predicated region
    $region29: #{generator_forward.1} parent=5 // pred_check
      _
    $region30: #{generator_forward.1} parent=5 // pred_check_branch
      %142 = sbr.rel (%p139) target = $region32
    $region31: #{generator_forward.1} parent=5 // pred_region
      %s143 = ssub.s32 %s9, 1
      %s144 = smul.u32 16, %s14
      %p145 = scmp.lt.s32.totalorder %s144, 31
      %s146 = scalar_select %p145, %s144, 31
      %s147 = smul.addr %s146, 4
      %s148 = scalar_lea.vmem %s0, %s147
      %p149 = pneg %p35
      %p150 = pneg %p32
      %p151 = pneg %p56
      %p152 = pneg %p53
      %p153 = pneg %p77
      %p154 = pneg %p74
      %p155 = pneg %p103
      %p156 = pneg %p100
      %s157 = smul.u32 16, %s14
      %p158 = scmp.lt.s32.totalorder %s157, 31
      %s159 = scalar_select %p158, %s157, 31
      %s160 = smul.addr %s159, 4
      %s161 = scalar_lea.vmem %s3, %s160
      %s162 = smul.u32 16, %s14
      %p163 = scmp.lt.s32.totalorder %s162, 31
      %s164 = scalar_select %p163, %s162, 31
      %s165 = smul.addr %s164, 4
      %s166 = scalar_lea.vmem %s0, %s165
      %s167 = smul.u32 16, %s14
      %s168 = smul.u32 16, %s14
      %p169 = scmp.lt.s32.totalorder %s168, 31
      %s170 = scalar_select %p169, %s168, 31
      %s171 = smul.addr %s170, 4
      %s172 = scalar_lea.vmem %s3, %s171
      %s173 = smul.u32 16, %s14
      %v175 = vld [vmem:[%s166] sm:$0xf]
      %v176 = vld [vmem:[%s166 + $0x4] sm:$0xf]
      %v177 = vld [vmem:[%s166 + $0x8] sm:$0xf]
      %v178 = vld [vmem:[%s166 + $0xc] sm:$0xf]
      %v179 = vld [vmem:[%s166 + $0x10] sm:$0xf]
      %v180 = vld [vmem:[%s166 + $0x14] sm:$0xf]
      %v181 = vld [vmem:[%s166 + $0x18] sm:$0xf]
      %v182 = vld [vmem:[%s166 + $0x1c] sm:$0xf]
      %v183 = vld [vmem:[%s166 + $0x20] sm:$0xf]
      %v184 = vld [vmem:[%s166 + $0x24] sm:$0xf]
      %v185 = vld [vmem:[%s166 + $0x28] sm:$0xf]
      %v186 = vld [vmem:[%s166 + $0x2c] sm:$0xf]
      %v187 = vld [vmem:[%s166 + $0x30] sm:$0xf]
      %v188 = vld [vmem:[%s166 + $0x34] sm:$0xf]
      %v189 = vld [vmem:[%s166 + $0x38] sm:$0xf]
      %v190 = vld [vmem:[%s166 + $0x3c] sm:$0xf]
      %v191 = vld [vmem:[%s1] sm:$0xf]
      %v192 = vld [vmem:[%s1 + $0x4] sm:$0xf]
      %v193 = vld [vmem:[%s1 + $0x8] sm:$0xf]
      %v194 = vld [vmem:[%s1 + $0xc] sm:$0xf]
      %v195 = vld [vmem:[%s1 + $0x10] sm:$0xf]
      %v196 = vld [vmem:[%s1 + $0x14] sm:$0xf]
      %v197 = vld [vmem:[%s1 + $0x18] sm:$0xf]
      %v198 = vld [vmem:[%s1 + $0x1c] sm:$0xf]
      %v199 = vld [vmem:[%s1 + $0x20] sm:$0xf]
      %v200 = vld [vmem:[%s1 + $0x24] sm:$0xf]
      %v201 = vld [vmem:[%s1 + $0x28] sm:$0xf]
      %v202 = vld [vmem:[%s1 + $0x2c] sm:$0xf]
      %v203 = vld [vmem:[%s1 + $0x30] sm:$0xf]
      %v204 = vld [vmem:[%s1 + $0x34] sm:$0xf]
      %v205 = vld [vmem:[%s1 + $0x38] sm:$0xf]
      %v206 = vld [vmem:[%s1 + $0x3c] sm:$0xf]
      %v207 = vld [vmem:[%s2] sm:$0x1]
      %v208 = vlaneseq
      %v209 = vshrl.u32 %v208, 7
      %v210 = vsub.s32 0, %v209
      %v211 = vrot.slane %v207, %v210
      %v228 = vunpack.c.l.b16 %v175
      %v229 = vunpack.c.l.b16 %v176
      %v230 = vunpack.c.l.b16 %v177
      %v231 = vunpack.c.l.b16 %v178
      %v232 = vunpack.c.l.b16 %v179
      %v233 = vunpack.c.l.b16 %v180
      %v234 = vunpack.c.l.b16 %v181
      %v235 = vunpack.c.l.b16 %v182
      %v236 = vunpack.c.l.b16 %v183
      %v237 = vunpack.c.l.b16 %v184
      %v238 = vunpack.c.l.b16 %v185
      %v239 = vunpack.c.l.b16 %v186
      %v240 = vunpack.c.l.b16 %v187
      %v241 = vunpack.c.l.b16 %v188
      %v242 = vunpack.c.l.b16 %v189
      %v243 = vunpack.c.l.b16 %v190
      %v244 = vpack.c.b16 %v229, %v228
      %v245 = vpack.c.b16 %v231, %v230
      %v246 = vpack.c.b16 %v233, %v232
      %v247 = vpack.c.b16 %v235, %v234
      %v248 = vpack.c.b16 %v237, %v236
      %v249 = vpack.c.b16 %v239, %v238
      %v250 = vpack.c.b16 %v241, %v240
      %v251 = vpack.c.b16 %v243, %v242
      %v276 = vunpack.c.l.b16 %v191
      %v277 = vunpack.c.l.b16 %v192
      %v278 = vunpack.c.l.b16 %v193
      %v279 = vunpack.c.l.b16 %v194
      %v280 = vunpack.c.l.b16 %v195
      %v281 = vunpack.c.l.b16 %v196
      %v282 = vunpack.c.l.b16 %v197
      %v283 = vunpack.c.l.b16 %v198
      %v284 = vunpack.c.l.b16 %v199
      %v285 = vunpack.c.l.b16 %v200
      %v286 = vunpack.c.l.b16 %v201
      %v287 = vunpack.c.l.b16 %v202
      %v288 = vunpack.c.l.b16 %v203
      %v289 = vunpack.c.l.b16 %v204
      %v290 = vunpack.c.l.b16 %v205
      %v291 = vunpack.c.l.b16 %v206
      %v292 = vpack.c.b16 %v277, %v276
      %v293 = vpack.c.b16 %v279, %v278
      %v294 = vpack.c.b16 %v281, %v280
      %v295 = vpack.c.b16 %v283, %v282
      %v296 = vpack.c.b16 %v285, %v284
      %v297 = vpack.c.b16 %v287, %v286
      %v298 = vpack.c.b16 %v289, %v288
      %v299 = vpack.c.b16 %v291, %v290
      %308 = vmatprep.subr.bf16.mxu0 0
      %309 = vmatpush1.bf16.msra.mxu0 %v299
      %310 = vmatprep.subr.bf16.mxu0 0
      %311 = vmatpush1.bf16.msra.mxu0 %v298
      %312 = vmatprep.subr.bf16.mxu0 0
      %313 = vmatpush1.bf16.msra.mxu0 %v297
      %314 = vmatprep.subr.bf16.mxu0 0
      %315 = vmatpush1.bf16.msra.mxu0 %v296
      %316 = vmatprep.subr.bf16.mxu0 0
      %317 = vmatpush1.bf16.msra.mxu0 %v295
      %318 = vmatprep.subr.bf16.mxu0 0
      %319 = vmatpush1.bf16.msra.mxu0 %v294
      %320 = vmatprep.subr.bf16.mxu0 0
      %321 = vmatpush1.bf16.msra.mxu0 %v293
      %322 = vmatprep.subr.bf16.mxu0 0
      %323 = vmatpush1.bf16.msra.mxu0 %v292
      %324 = vmatprep.subr.bf16.mxu0 0
      %325 = vmatpush2.bf16.msra.mxu0 0
      %326 = vmatprep.subr.bf16.mxu0 0
      %327 = vmatpush2.bf16.msra.mxu0 0
      %328 = vmatprep.subr.bf16.mxu0 0
      %329 = vmatpush2.bf16.msra.mxu0 0
      %330 = vmatprep.subr.bf16.mxu0 0
      %331 = vmatpush2.bf16.msra.mxu0 0
      %332 = vmatprep.subr.bf16.mxu0 0
      %333 = vmatpush2.bf16.msra.mxu0 0
      %334 = vmatprep.subr.bf16.mxu0 0
      %335 = vmatpush2.bf16.msra.mxu0 0
      %336 = vmatprep.subr.bf16.mxu0 0
      %337 = vmatpush2.bf16.msra.mxu0 0
      %338 = vmatprep.subr.bf16.mxu0 0
      %339 = vmatpush2.bf16.msra.mxu0 0
      %340 = vmatprep.mubr.bf16.mxu0 0
      %341 = vmatmul.mubr.bf16.gmra.mxu0 %v244
      %v342 = vpop.f32.mrf.mxu0
      %v343 = vadd.f32 %v211, %v342
      %v344 = vpop.f32.mrf.mxu0
      %v345 = vpop.f32.mrf.mxu0
      %v346 = vadd.f32 %v211, %v345
      %v347 = vpop.f32.mrf.mxu0
      %348 = vmatprep.mubr.bf16.mxu0 0
      %349 = vmatmul.mubr.bf16.gmra.mxu0 %v245
      %v350 = vpop.f32.mrf.mxu0
      %v351 = vadd.f32 %v211, %v350
      %v352 = vpop.f32.mrf.mxu0
      %v353 = vpop.f32.mrf.mxu0
      %v354 = vadd.f32 %v211, %v353
      %v355 = vpop.f32.mrf.mxu0
      %356 = vmatprep.mubr.bf16.mxu0 0
      %357 = vmatmul.mubr.bf16.gmra.mxu0 %v246
      %v358 = vpop.f32.mrf.mxu0
      %v359 = vadd.f32 %v211, %v358
      %v360 = vpop.f32.mrf.mxu0
      %v361 = vpop.f32.mrf.mxu0
      %v362 = vadd.f32 %v211, %v361
      %v363 = vpop.f32.mrf.mxu0
      %364 = vmatprep.mubr.bf16.mxu0 0
      %365 = vmatmul.mubr.bf16.gmra.mxu0 %v247
      %v366 = vpop.f32.mrf.mxu0
      %v367 = vadd.f32 %v211, %v366
      %v368 = vpop.f32.mrf.mxu0
      %v369 = vpop.f32.mrf.mxu0
      %v370 = vadd.f32 %v211, %v369
      %v371 = vpop.f32.mrf.mxu0
      %372 = vmatprep.mubr.bf16.mxu0 0
      %373 = vmatmul.mubr.bf16.gmra.mxu0 %v248
      %v374 = vpop.f32.mrf.mxu0
      %v375 = vadd.f32 %v211, %v374
      %v376 = vpop.f32.mrf.mxu0
      %v377 = vpop.f32.mrf.mxu0
      %v378 = vadd.f32 %v211, %v377
      %v379 = vpop.f32.mrf.mxu0
      %380 = vmatprep.mubr.bf16.mxu0 0
      %381 = vmatmul.mubr.bf16.gmra.mxu0 %v249
      %v382 = vpop.f32.mrf.mxu0
      %v383 = vadd.f32 %v211, %v382
      %v384 = vpop.f32.mrf.mxu0
      %v385 = vpop.f32.mrf.mxu0
      %v386 = vadd.f32 %v211, %v385
      %v387 = vpop.f32.mrf.mxu0
      %388 = vmatprep.mubr.bf16.mxu0 0
      %389 = vmatmul.mubr.bf16.gmra.mxu0 %v250
      %v390 = vpop.f32.mrf.mxu0
      %v391 = vadd.f32 %v211, %v390
      %v392 = vpop.f32.mrf.mxu0
      %v393 = vpop.f32.mrf.mxu0
      %v394 = vadd.f32 %v211, %v393
      %v395 = vpop.f32.mrf.mxu0
      %396 = vmatprep.mubr.bf16.mxu0 0
      %397 = vmatmul.mubr.bf16.gmra.mxu0 %v251
      %v398 = vpop.f32.mrf.mxu0
      %v399 = vadd.f32 %v211, %v398
      %v400 = vpop.f32.mrf.mxu0
      %v401 = vpop.f32.mrf.mxu0
      %v402 = vadd.f32 %v211, %v401
      %v403 = vpop.f32.mrf.mxu0
      %404 = vdwg.mxu0
      %v405 = vmax.f32 %v343, 0.0
      %v406 = vmax.f32 %v346, 0.0
      %v407 = vmax.f32 %v351, 0.0
      %v408 = vmax.f32 %v354, 0.0
      %v409 = vmax.f32 %v359, 0.0
      %v410 = vmax.f32 %v362, 0.0
      %v411 = vmax.f32 %v367, 0.0
      %v412 = vmax.f32 %v370, 0.0
      %v413 = vmax.f32 %v375, 0.0
      %v414 = vmax.f32 %v378, 0.0
      %v415 = vmax.f32 %v383, 0.0
      %v416 = vmax.f32 %v386, 0.0
      %v417 = vmax.f32 %v391, 0.0
      %v418 = vmax.f32 %v394, 0.0
      %v419 = vmax.f32 %v399, 0.0
      %v420 = vmax.f32 %v402, 0.0
      %v421 = vpack.c.bf16 %v406, %v405
      %v422 = vpack.c.bf16 %v408, %v407
      %v423 = vpack.c.bf16 %v410, %v409
      %v424 = vpack.c.bf16 %v412, %v411
      %v425 = vpack.c.bf16 %v414, %v413
      %v426 = vpack.c.bf16 %v416, %v415
      %v427 = vpack.c.bf16 %v418, %v417
      %v428 = vpack.c.bf16 %v420, %v419
      %s429 = scalar_lea.vmem %s1, 64
      %v430 = vld [vmem:[%s429] sm:$0xf]
      %v431 = vld [vmem:[%s429 + $0x4] sm:$0xf]
      %v432 = vld [vmem:[%s429 + $0x8] sm:$0xf]
      %v433 = vld [vmem:[%s429 + $0xc] sm:$0xf]
      %v434 = vld [vmem:[%s429 + $0x10] sm:$0xf]
      %v435 = vld [vmem:[%s429 + $0x14] sm:$0xf]
      %v436 = vld [vmem:[%s429 + $0x18] sm:$0xf]
      %v437 = vld [vmem:[%s429 + $0x1c] sm:$0xf]
      %v438 = vld [vmem:[%s429 + $0x20] sm:$0xf]
      %v439 = vld [vmem:[%s429 + $0x24] sm:$0xf]
      %v440 = vld [vmem:[%s429 + $0x28] sm:$0xf]
      %v441 = vld [vmem:[%s429 + $0x2c] sm:$0xf]
      %v442 = vld [vmem:[%s429 + $0x30] sm:$0xf]
      %v443 = vld [vmem:[%s429 + $0x34] sm:$0xf]
      %v444 = vld [vmem:[%s429 + $0x38] sm:$0xf]
      %v445 = vld [vmem:[%s429 + $0x3c] sm:$0xf]
      %v446 = vld [vmem:[%s2 + $0x1] sm:$0x1]
      %v447 = vlaneseq
      %v448 = vshrl.u32 %v447, 7
      %v449 = vsub.s32 0, %v448
      %v450 = vrot.slane %v446, %v449
      %v467 = vunpack.c.l.b16 %v430
      %v468 = vunpack.c.l.b16 %v431
      %v469 = vunpack.c.l.b16 %v432
      %v470 = vunpack.c.l.b16 %v433
      %v471 = vunpack.c.l.b16 %v434
      %v472 = vunpack.c.l.b16 %v435
      %v473 = vunpack.c.l.b16 %v436
      %v474 = vunpack.c.l.b16 %v437
      %v475 = vunpack.c.l.b16 %v438
      %v476 = vunpack.c.l.b16 %v439
      %v477 = vunpack.c.l.b16 %v440
      %v478 = vunpack.c.l.b16 %v441
      %v479 = vunpack.c.l.b16 %v442
      %v480 = vunpack.c.l.b16 %v443
      %v481 = vunpack.c.l.b16 %v444
      %v482 = vunpack.c.l.b16 %v445
      %v483 = vpack.c.b16 %v468, %v467
      %v484 = vpack.c.b16 %v470, %v469
      %v485 = vpack.c.b16 %v472, %v471
      %v486 = vpack.c.b16 %v474, %v473
      %v487 = vpack.c.b16 %v476, %v475
      %v488 = vpack.c.b16 %v478, %v477
      %v489 = vpack.c.b16 %v480, %v479
      %v490 = vpack.c.b16 %v482, %v481
      %499 = vmatprep.subr.bf16.mxu0 0
      %500 = vmatpush1.bf16.msra.mxu0 %v490
      %501 = vmatprep.subr.bf16.mxu0 0
      %502 = vmatpush1.bf16.msra.mxu0 %v489
      %503 = vmatprep.subr.bf16.mxu0 0
      %504 = vmatpush1.bf16.msra.mxu0 %v488
      %505 = vmatprep.subr.bf16.mxu0 0
      %506 = vmatpush1.bf16.msra.mxu0 %v487
      %507 = vmatprep.subr.bf16.mxu0 0
      %508 = vmatpush1.bf16.msra.mxu0 %v486
      %509 = vmatprep.subr.bf16.mxu0 0
      %510 = vmatpush1.bf16.msra.mxu0 %v485
      %511 = vmatprep.subr.bf16.mxu0 0
      %512 = vmatpush1.bf16.msra.mxu0 %v484
      %513 = vmatprep.subr.bf16.mxu0 0
      %514 = vmatpush1.bf16.msra.mxu0 %v483
      %515 = vmatprep.subr.bf16.mxu0 0
      %516 = vmatpush2.bf16.msra.mxu0 0
      %517 = vmatprep.subr.bf16.mxu0 0
      %518 = vmatpush2.bf16.msra.mxu0 0
      %519 = vmatprep.subr.bf16.mxu0 0
      %520 = vmatpush2.bf16.msra.mxu0 0
      %521 = vmatprep.subr.bf16.mxu0 0
      %522 = vmatpush2.bf16.msra.mxu0 0
      %523 = vmatprep.subr.bf16.mxu0 0
      %524 = vmatpush2.bf16.msra.mxu0 0
      %525 = vmatprep.subr.bf16.mxu0 0
      %526 = vmatpush2.bf16.msra.mxu0 0
      %527 = vmatprep.subr.bf16.mxu0 0
      %528 = vmatpush2.bf16.msra.mxu0 0
      %529 = vmatprep.subr.bf16.mxu0 0
      %530 = vmatpush2.bf16.msra.mxu0 0
      %531 = vmatprep.mubr.bf16.mxu0 0
      %532 = vmatmul.mubr.bf16.gmra.mxu0 %v421
      %v533 = vpop.f32.mrf.mxu0
      %v534 = vadd.f32 %v450, %v533
      %v535 = vpop.f32.mrf.mxu0
      %v536 = vpop.f32.mrf.mxu0
      %v537 = vadd.f32 %v450, %v536
      %v538 = vpop.f32.mrf.mxu0
      %539 = vmatprep.mubr.bf16.mxu0 0
      %540 = vmatmul.mubr.bf16.gmra.mxu0 %v422
      %v541 = vpop.f32.mrf.mxu0
      %v542 = vadd.f32 %v450, %v541
      %v543 = vpop.f32.mrf.mxu0
      %v544 = vpop.f32.mrf.mxu0
      %v545 = vadd.f32 %v450, %v544
      %v546 = vpop.f32.mrf.mxu0
      %547 = vmatprep.mubr.bf16.mxu0 0
      %548 = vmatmul.mubr.bf16.gmra.mxu0 %v423
      %v549 = vpop.f32.mrf.mxu0
      %v550 = vadd.f32 %v450, %v549
      %v551 = vpop.f32.mrf.mxu0
      %v552 = vpop.f32.mrf.mxu0
      %v553 = vadd.f32 %v450, %v552
      %v554 = vpop.f32.mrf.mxu0
      %555 = vmatprep.mubr.bf16.mxu0 0
      %556 = vmatmul.mubr.bf16.gmra.mxu0 %v424
      %v557 = vpop.f32.mrf.mxu0
      %v558 = vadd.f32 %v450, %v557
      %v559 = vpop.f32.mrf.mxu0
      %v560 = vpop.f32.mrf.mxu0
      %v561 = vadd.f32 %v450, %v560
      %v562 = vpop.f32.mrf.mxu0
      %563 = vmatprep.mubr.bf16.mxu0 0
      %564 = vmatmul.mubr.bf16.gmra.mxu0 %v425
      %v565 = vpop.f32.mrf.mxu0
      %v566 = vadd.f32 %v450, %v565
      %v567 = vpop.f32.mrf.mxu0
      %v568 = vpop.f32.mrf.mxu0
      %v569 = vadd.f32 %v450, %v568
      %v570 = vpop.f32.mrf.mxu0
      %571 = vmatprep.mubr.bf16.mxu0 0
      %572 = vmatmul.mubr.bf16.gmra.mxu0 %v426
      %v573 = vpop.f32.mrf.mxu0
      %v574 = vadd.f32 %v450, %v573
      %v575 = vpop.f32.mrf.mxu0
      %v576 = vpop.f32.mrf.mxu0
      %v577 = vadd.f32 %v450, %v576
      %v578 = vpop.f32.mrf.mxu0
      %579 = vmatprep.mubr.bf16.mxu0 0
      %580 = vmatmul.mubr.bf16.gmra.mxu0 %v427
      %v581 = vpop.f32.mrf.mxu0
      %v582 = vadd.f32 %v450, %v581
      %v583 = vpop.f32.mrf.mxu0
      %v584 = vpop.f32.mrf.mxu0
      %v585 = vadd.f32 %v450, %v584
      %v586 = vpop.f32.mrf.mxu0
      %587 = vmatprep.mubr.bf16.mxu0 0
      %588 = vmatmul.mubr.bf16.gmra.mxu0 %v428
      %v589 = vpop.f32.mrf.mxu0
      %v590 = vadd.f32 %v450, %v589
      %v591 = vpop.f32.mrf.mxu0
      %v592 = vpop.f32.mrf.mxu0
      %v593 = vadd.f32 %v450, %v592
      %v594 = vpop.f32.mrf.mxu0
      %595 = vdwg.mxu0
      %v596 = vmax.f32 %v534, 0.0
      %v597 = vmax.f32 %v537, 0.0
      %v598 = vmax.f32 %v542, 0.0
      %v599 = vmax.f32 %v545, 0.0
      %v600 = vmax.f32 %v550, 0.0
      %v601 = vmax.f32 %v553, 0.0
      %v602 = vmax.f32 %v558, 0.0
      %v603 = vmax.f32 %v561, 0.0
      %v604 = vmax.f32 %v566, 0.0
      %v605 = vmax.f32 %v569, 0.0
      %v606 = vmax.f32 %v574, 0.0
      %v607 = vmax.f32 %v577, 0.0
      %v608 = vmax.f32 %v582, 0.0
      %v609 = vmax.f32 %v585, 0.0
      %v610 = vmax.f32 %v590, 0.0
      %v611 = vmax.f32 %v593, 0.0
      %v612 = vpack.c.bf16 %v597, %v596
      %v613 = vpack.c.bf16 %v599, %v598
      %v614 = vpack.c.bf16 %v601, %v600
      %v615 = vpack.c.bf16 %v603, %v602
      %v616 = vpack.c.bf16 %v605, %v604
      %v617 = vpack.c.bf16 %v607, %v606
      %v618 = vpack.c.bf16 %v609, %v608
      %v619 = vpack.c.bf16 %v611, %v610
      %s620 = scalar_lea.vmem %s1, 128
      %v621 = vld [vmem:[%s620] sm:$0xf]
      %v622 = vld [vmem:[%s620 + $0x4] sm:$0xf]
      %v623 = vld [vmem:[%s620 + $0x8] sm:$0xf]
      %v624 = vld [vmem:[%s620 + $0xc] sm:$0xf]
      %v625 = vld [vmem:[%s620 + $0x10] sm:$0xf]
      %v626 = vld [vmem:[%s620 + $0x14] sm:$0xf]
      %v627 = vld [vmem:[%s620 + $0x18] sm:$0xf]
      %v628 = vld [vmem:[%s620 + $0x1c] sm:$0xf]
      %v629 = vld [vmem:[%s620 + $0x20] sm:$0xf]
      %v630 = vld [vmem:[%s620 + $0x24] sm:$0xf]
      %v631 = vld [vmem:[%s620 + $0x28] sm:$0xf]
      %v632 = vld [vmem:[%s620 + $0x2c] sm:$0xf]
      %v633 = vld [vmem:[%s620 + $0x30] sm:$0xf]
      %v634 = vld [vmem:[%s620 + $0x34] sm:$0xf]
      %v635 = vld [vmem:[%s620 + $0x38] sm:$0xf]
      %v636 = vld [vmem:[%s620 + $0x3c] sm:$0xf]
      %v637 = vld [vmem:[%s2 + $0x2] sm:$0x1]
      %v638 = vlaneseq
      %v639 = vshrl.u32 %v638, 7
      %v640 = vsub.s32 0, %v639
      %v641 = vrot.slane %v637, %v640
      %v658 = vunpack.c.l.b16 %v621
      %v659 = vunpack.c.l.b16 %v622
      %v660 = vunpack.c.l.b16 %v623
      %v661 = vunpack.c.l.b16 %v624
      %v662 = vunpack.c.l.b16 %v625
      %v663 = vunpack.c.l.b16 %v626
      %v664 = vunpack.c.l.b16 %v627
      %v665 = vunpack.c.l.b16 %v628
      %v666 = vunpack.c.l.b16 %v629
      %v667 = vunpack.c.l.b16 %v630
      %v668 = vunpack.c.l.b16 %v631
      %v669 = vunpack.c.l.b16 %v632
      %v670 = vunpack.c.l.b16 %v633
      %v671 = vunpack.c.l.b16 %v634
      %v672 = vunpack.c.l.b16 %v635
      %v673 = vunpack.c.l.b16 %v636
      %v674 = vpack.c.b16 %v659, %v658
      %v675 = vpack.c.b16 %v661, %v660
      %v676 = vpack.c.b16 %v663, %v662
      %v677 = vpack.c.b16 %v665, %v664
      %v678 = vpack.c.b16 %v667, %v666
      %v679 = vpack.c.b16 %v669, %v668
      %v680 = vpack.c.b16 %v671, %v670
      %v681 = vpack.c.b16 %v673, %v672
      %690 = vmatprep.subr.bf16.mxu0 0
      %691 = vmatpush1.bf16.msra.mxu0 %v681
      %692 = vmatprep.subr.bf16.mxu0 0
      %693 = vmatpush1.bf16.msra.mxu0 %v680
      %694 = vmatprep.subr.bf16.mxu0 0
      %695 = vmatpush1.bf16.msra.mxu0 %v679
      %696 = vmatprep.subr.bf16.mxu0 0
      %697 = vmatpush1.bf16.msra.mxu0 %v678
      %698 = vmatprep.subr.bf16.mxu0 0
      %699 = vmatpush1.bf16.msra.mxu0 %v677
      %700 = vmatprep.subr.bf16.mxu0 0
      %701 = vmatpush1.bf16.msra.mxu0 %v676
      %702 = vmatprep.subr.bf16.mxu0 0
      %703 = vmatpush1.bf16.msra.mxu0 %v675
      %704 = vmatprep.subr.bf16.mxu0 0
      %705 = vmatpush1.bf16.msra.mxu0 %v674
      %706 = vmatprep.subr.bf16.mxu0 0
      %707 = vmatpush2.bf16.msra.mxu0 0
      %708 = vmatprep.subr.bf16.mxu0 0
      %709 = vmatpush2.bf16.msra.mxu0 0
      %710 = vmatprep.subr.bf16.mxu0 0
      %711 = vmatpush2.bf16.msra.mxu0 0
      %712 = vmatprep.subr.bf16.mxu0 0
      %713 = vmatpush2.bf16.msra.mxu0 0
      %714 = vmatprep.subr.bf16.mxu0 0
      %715 = vmatpush2.bf16.msra.mxu0 0
      %716 = vmatprep.subr.bf16.mxu0 0
      %717 = vmatpush2.bf16.msra.mxu0 0
      %718 = vmatprep.subr.bf16.mxu0 0
      %719 = vmatpush2.bf16.msra.mxu0 0
      %720 = vmatprep.subr.bf16.mxu0 0
      %721 = vmatpush2.bf16.msra.mxu0 0
      %722 = vmatprep.mubr.bf16.mxu0 0
      %723 = vmatmul.mubr.bf16.gmra.mxu0 %v612
      %v724 = vpop.f32.mrf.mxu0
      %v725 = vadd.f32 %v641, %v724
      %v726 = vpop.f32.mrf.mxu0
      %v727 = vpop.f32.mrf.mxu0
      %v728 = vadd.f32 %v641, %v727
      %v729 = vpop.f32.mrf.mxu0
      %730 = vmatprep.mubr.bf16.mxu0 0
      %731 = vmatmul.mubr.bf16.gmra.mxu0 %v613
      %v732 = vpop.f32.mrf.mxu0
      %v733 = vadd.f32 %v641, %v732
      %v734 = vpop.f32.mrf.mxu0
      %v735 = vpop.f32.mrf.mxu0
      %v736 = vadd.f32 %v641, %v735
      %v737 = vpop.f32.mrf.mxu0
      %738 = vmatprep.mubr.bf16.mxu0 0
      %739 = vmatmul.mubr.bf16.gmra.mxu0 %v614
      %v740 = vpop.f32.mrf.mxu0
      %v741 = vadd.f32 %v641, %v740
      %v742 = vpop.f32.mrf.mxu0
      %v743 = vpop.f32.mrf.mxu0
      %v744 = vadd.f32 %v641, %v743
      %v745 = vpop.f32.mrf.mxu0
      %746 = vmatprep.mubr.bf16.mxu0 0
      %747 = vmatmul.mubr.bf16.gmra.mxu0 %v615
      %v748 = vpop.f32.mrf.mxu0
      %v749 = vadd.f32 %v641, %v748
      %v750 = vpop.f32.mrf.mxu0
      %v751 = vpop.f32.mrf.mxu0
      %v752 = vadd.f32 %v641, %v751
      %v753 = vpop.f32.mrf.mxu0
      %754 = vmatprep.mubr.bf16.mxu0 0
      %755 = vmatmul.mubr.bf16.gmra.mxu0 %v616
      %v756 = vpop.f32.mrf.mxu0
      %v757 = vadd.f32 %v641, %v756
      %v758 = vpop.f32.mrf.mxu0
      %v759 = vpop.f32.mrf.mxu0
      %v760 = vadd.f32 %v641, %v759
      %v761 = vpop.f32.mrf.mxu0
      %762 = vmatprep.mubr.bf16.mxu0 0
      %763 = vmatmul.mubr.bf16.gmra.mxu0 %v617
      %v764 = vpop.f32.mrf.mxu0
      %v765 = vadd.f32 %v641, %v764
      %v766 = vpop.f32.mrf.mxu0
      %v767 = vpop.f32.mrf.mxu0
      %v768 = vadd.f32 %v641, %v767
      %v769 = vpop.f32.mrf.mxu0
      %770 = vmatprep.mubr.bf16.mxu0 0
      %771 = vmatmul.mubr.bf16.gmra.mxu0 %v618
      %v772 = vpop.f32.mrf.mxu0
      %v773 = vadd.f32 %v641, %v772
      %v774 = vpop.f32.mrf.mxu0
      %v775 = vpop.f32.mrf.mxu0
      %v776 = vadd.f32 %v641, %v775
      %v777 = vpop.f32.mrf.mxu0
      %778 = vmatprep.mubr.bf16.mxu0 0
      %779 = vmatmul.mubr.bf16.gmra.mxu0 %v619
      %v780 = vpop.f32.mrf.mxu0
      %v781 = vadd.f32 %v641, %v780
      %v782 = vpop.f32.mrf.mxu0
      %v783 = vpop.f32.mrf.mxu0
      %v784 = vadd.f32 %v641, %v783
      %v785 = vpop.f32.mrf.mxu0
      %786 = vdwg.mxu0
      %v787 = vmax.f32 %v725, 0.0
      %v788 = vmax.f32 %v728, 0.0
      %v789 = vmax.f32 %v733, 0.0
      %v790 = vmax.f32 %v736, 0.0
      %v791 = vmax.f32 %v741, 0.0
      %v792 = vmax.f32 %v744, 0.0
      %v793 = vmax.f32 %v749, 0.0
      %v794 = vmax.f32 %v752, 0.0
      %v795 = vmax.f32 %v757, 0.0
      %v796 = vmax.f32 %v760, 0.0
      %v797 = vmax.f32 %v765, 0.0
      %v798 = vmax.f32 %v768, 0.0
      %v799 = vmax.f32 %v773, 0.0
      %v800 = vmax.f32 %v776, 0.0
      %v801 = vmax.f32 %v781, 0.0
      %v802 = vmax.f32 %v784, 0.0
      %v803 = vpack.c.bf16 %v788, %v787
      %v804 = vpack.c.bf16 %v790, %v789
      %v805 = vpack.c.bf16 %v792, %v791
      %v806 = vpack.c.bf16 %v794, %v793
      %v807 = vpack.c.bf16 %v796, %v795
      %v808 = vpack.c.bf16 %v798, %v797
      %v809 = vpack.c.bf16 %v800, %v799
      %v810 = vpack.c.bf16 %v802, %v801
      %s811 = scalar_lea.vmem %s1, 192
      %v812 = vld [vmem:[%s811] sm:$0xf]
      %v813 = vld [vmem:[%s811 + $0x4] sm:$0xf]
      %v814 = vld [vmem:[%s811 + $0x8] sm:$0xf]
      %v815 = vld [vmem:[%s811 + $0xc] sm:$0xf]
      %v816 = vld [vmem:[%s811 + $0x10] sm:$0xf]
      %v817 = vld [vmem:[%s811 + $0x14] sm:$0xf]
      %v818 = vld [vmem:[%s811 + $0x18] sm:$0xf]
      %v819 = vld [vmem:[%s811 + $0x1c] sm:$0xf]
      %v820 = vld [vmem:[%s811 + $0x20] sm:$0xf]
      %v821 = vld [vmem:[%s811 + $0x24] sm:$0xf]
      %v822 = vld [vmem:[%s811 + $0x28] sm:$0xf]
      %v823 = vld [vmem:[%s811 + $0x2c] sm:$0xf]
      %v824 = vld [vmem:[%s811 + $0x30] sm:$0xf]
      %v825 = vld [vmem:[%s811 + $0x34] sm:$0xf]
      %v826 = vld [vmem:[%s811 + $0x38] sm:$0xf]
      %v827 = vld [vmem:[%s811 + $0x3c] sm:$0xf]
      %v828 = vld [vmem:[%s2 + $0x3] sm:$0x1]
      %v829 = vlaneseq
      %v830 = vshrl.u32 %v829, 7
      %v831 = vsub.s32 0, %v830
      %v832 = vrot.slane %v828, %v831
      %v849 = vunpack.c.l.b16 %v812
      %v850 = vunpack.c.l.b16 %v813
      %v851 = vunpack.c.l.b16 %v814
      %v852 = vunpack.c.l.b16 %v815
      %v853 = vunpack.c.l.b16 %v816
      %v854 = vunpack.c.l.b16 %v817
      %v855 = vunpack.c.l.b16 %v818
      %v856 = vunpack.c.l.b16 %v819
      %v857 = vunpack.c.l.b16 %v820
      %v858 = vunpack.c.l.b16 %v821
      %v859 = vunpack.c.l.b16 %v822
      %v860 = vunpack.c.l.b16 %v823
      %v861 = vunpack.c.l.b16 %v824
      %v862 = vunpack.c.l.b16 %v825
      %v863 = vunpack.c.l.b16 %v826
      %v864 = vunpack.c.l.b16 %v827
      %v865 = vpack.c.b16 %v850, %v849
      %v866 = vpack.c.b16 %v852, %v851
      %v867 = vpack.c.b16 %v854, %v853
      %v868 = vpack.c.b16 %v856, %v855
      %v869 = vpack.c.b16 %v858, %v857
      %v870 = vpack.c.b16 %v860, %v859
      %v871 = vpack.c.b16 %v862, %v861
      %v872 = vpack.c.b16 %v864, %v863
      %881 = vmatprep.subr.bf16.mxu0 0
      %882 = vmatpush1.bf16.msra.mxu0 %v872
      %883 = vmatprep.subr.bf16.mxu0 0
      %884 = vmatpush1.bf16.msra.mxu0 %v871
      %885 = vmatprep.subr.bf16.mxu0 0
      %886 = vmatpush1.bf16.msra.mxu0 %v870
      %887 = vmatprep.subr.bf16.mxu0 0
      %888 = vmatpush1.bf16.msra.mxu0 %v869
      %889 = vmatprep.subr.bf16.mxu0 0
      %890 = vmatpush1.bf16.msra.mxu0 %v868
      %891 = vmatprep.subr.bf16.mxu0 0
      %892 = vmatpush1.bf16.msra.mxu0 %v867
      %893 = vmatprep.subr.bf16.mxu0 0
      %894 = vmatpush1.bf16.msra.mxu0 %v866
      %895 = vmatprep.subr.bf16.mxu0 0
      %896 = vmatpush1.bf16.msra.mxu0 %v865
      %897 = vmatprep.subr.bf16.mxu0 0
      %898 = vmatpush2.bf16.msra.mxu0 0
      %899 = vmatprep.subr.bf16.mxu0 0
      %900 = vmatpush2.bf16.msra.mxu0 0
      %901 = vmatprep.subr.bf16.mxu0 0
      %902 = vmatpush2.bf16.msra.mxu0 0
      %903 = vmatprep.subr.bf16.mxu0 0
      %904 = vmatpush2.bf16.msra.mxu0 0
      %905 = vmatprep.subr.bf16.mxu0 0
      %906 = vmatpush2.bf16.msra.mxu0 0
      %907 = vmatprep.subr.bf16.mxu0 0
      %908 = vmatpush2.bf16.msra.mxu0 0
      %909 = vmatprep.subr.bf16.mxu0 0
      %910 = vmatpush2.bf16.msra.mxu0 0
      %911 = vmatprep.subr.bf16.mxu0 0
      %912 = vmatpush2.bf16.msra.mxu0 0
      %913 = vmatprep.mubr.bf16.mxu0 0
      %914 = vmatmul.mubr.bf16.gmra.mxu0 %v803
      %v915 = vpop.f32.mrf.mxu0
      %v916 = vadd.f32 %v832, %v915
      %v917 = vpop.f32.mrf.mxu0
      %v918 = vpop.f32.mrf.mxu0
      %v919 = vadd.f32 %v832, %v918
      %v920 = vpop.f32.mrf.mxu0
      %921 = vmatprep.mubr.bf16.mxu0 0
      %922 = vmatmul.mubr.bf16.gmra.mxu0 %v804
      %v923 = vpop.f32.mrf.mxu0
      %v924 = vadd.f32 %v832, %v923
      %v925 = vpop.f32.mrf.mxu0
      %v926 = vpop.f32.mrf.mxu0
      %v927 = vadd.f32 %v832, %v926
      %v928 = vpop.f32.mrf.mxu0
      %929 = vmatprep.mubr.bf16.mxu0 0
      %930 = vmatmul.mubr.bf16.gmra.mxu0 %v805
      %v931 = vpop.f32.mrf.mxu0
      %v932 = vadd.f32 %v832, %v931
      %v933 = vpop.f32.mrf.mxu0
      %v934 = vpop.f32.mrf.mxu0
      %v935 = vadd.f32 %v832, %v934
      %v936 = vpop.f32.mrf.mxu0
      %937 = vmatprep.mubr.bf16.mxu0 0
      %938 = vmatmul.mubr.bf16.gmra.mxu0 %v806
      %v939 = vpop.f32.mrf.mxu0
      %v940 = vadd.f32 %v832, %v939
      %v941 = vpop.f32.mrf.mxu0
      %v942 = vpop.f32.mrf.mxu0
      %v943 = vadd.f32 %v832, %v942
      %v944 = vpop.f32.mrf.mxu0
      %945 = vmatprep.mubr.bf16.mxu0 0
      %946 = vmatmul.mubr.bf16.gmra.mxu0 %v807
      %v947 = vpop.f32.mrf.mxu0
      %v948 = vadd.f32 %v832, %v947
      %v949 = vpop.f32.mrf.mxu0
      %v950 = vpop.f32.mrf.mxu0
      %v951 = vadd.f32 %v832, %v950
      %v952 = vpop.f32.mrf.mxu0
      %953 = vmatprep.mubr.bf16.mxu0 0
      %954 = vmatmul.mubr.bf16.gmra.mxu0 %v808
      %v955 = vpop.f32.mrf.mxu0
      %v956 = vadd.f32 %v832, %v955
      %v957 = vpop.f32.mrf.mxu0
      %v958 = vpop.f32.mrf.mxu0
      %v959 = vadd.f32 %v832, %v958
      %v960 = vpop.f32.mrf.mxu0
      %961 = vmatprep.mubr.bf16.mxu0 0
      %962 = vmatmul.mubr.bf16.gmra.mxu0 %v809
      %v963 = vpop.f32.mrf.mxu0
      %v964 = vadd.f32 %v832, %v963
      %v965 = vpop.f32.mrf.mxu0
      %v966 = vpop.f32.mrf.mxu0
      %v967 = vadd.f32 %v832, %v966
      %v968 = vpop.f32.mrf.mxu0
      %969 = vmatprep.mubr.bf16.mxu0 0
      %970 = vmatmul.mubr.bf16.gmra.mxu0 %v810
      %v971 = vpop.f32.mrf.mxu0
      %v972 = vadd.f32 %v832, %v971
      %v973 = vpop.f32.mrf.mxu0
      %v974 = vpop.f32.mrf.mxu0
      %v975 = vadd.f32 %v832, %v974
      %v976 = vpop.f32.mrf.mxu0
      %977 = vdwg.mxu0
      %v978 = vmax.f32 %v916, 0.0
      %v979 = vmax.f32 %v919, 0.0
      %v980 = vmax.f32 %v924, 0.0
      %v981 = vmax.f32 %v927, 0.0
      %v982 = vmax.f32 %v932, 0.0
      %v983 = vmax.f32 %v935, 0.0
      %v984 = vmax.f32 %v940, 0.0
      %v985 = vmax.f32 %v943, 0.0
      %v986 = vmax.f32 %v948, 0.0
      %v987 = vmax.f32 %v951, 0.0
      %v988 = vmax.f32 %v956, 0.0
      %v989 = vmax.f32 %v959, 0.0
      %v990 = vmax.f32 %v964, 0.0
      %v991 = vmax.f32 %v967, 0.0
      %v992 = vmax.f32 %v972, 0.0
      %v993 = vmax.f32 %v975, 0.0
      %v994 = vpack.c.bf16 %v979, %v978
      %v995 = vpack.c.bf16 %v981, %v980
      %v996 = vpack.c.bf16 %v983, %v982
      %v997 = vpack.c.bf16 %v985, %v984
      %v998 = vpack.c.bf16 %v987, %v986
      %v999 = vpack.c.bf16 %v989, %v988
      %v1000 = vpack.c.bf16 %v991, %v990
      %v1001 = vpack.c.bf16 %v993, %v992
      %s1002 = scalar_lea.vmem %s1, 256
      %v1003 = vld [vmem:[%s1002] sm:$0xf]
      %v1004 = vld [vmem:[%s1002 + $0x4] sm:$0xf]
      %v1005 = vld [vmem:[%s1002 + $0x8] sm:$0xf]
      %v1006 = vld [vmem:[%s1002 + $0xc] sm:$0xf]
      %v1007 = vld [vmem:[%s1002 + $0x10] sm:$0xf]
      %v1008 = vld [vmem:[%s1002 + $0x14] sm:$0xf]
      %v1009 = vld [vmem:[%s1002 + $0x18] sm:$0xf]
      %v1010 = vld [vmem:[%s1002 + $0x1c] sm:$0xf]
      %v1011 = vld [vmem:[%s1002 + $0x20] sm:$0xf]
      %v1012 = vld [vmem:[%s1002 + $0x24] sm:$0xf]
      %v1013 = vld [vmem:[%s1002 + $0x28] sm:$0xf]
      %v1014 = vld [vmem:[%s1002 + $0x2c] sm:$0xf]
      %v1015 = vld [vmem:[%s1002 + $0x30] sm:$0xf]
      %v1016 = vld [vmem:[%s1002 + $0x34] sm:$0xf]
      %v1017 = vld [vmem:[%s1002 + $0x38] sm:$0xf]
      %v1018 = vld [vmem:[%s1002 + $0x3c] sm:$0xf]
      %v1019 = vld [vmem:[%s2 + $0x4] sm:$0x1]
      %v1020 = vlaneseq
      %v1021 = vshrl.u32 %v1020, 7
      %v1022 = vsub.s32 0, %v1021
      %v1023 = vrot.slane %v1019, %v1022
      %v1040 = vunpack.c.l.b16 %v1003
      %v1041 = vunpack.c.l.b16 %v1004
      %v1042 = vunpack.c.l.b16 %v1005
      %v1043 = vunpack.c.l.b16 %v1006
      %v1044 = vunpack.c.l.b16 %v1007
      %v1045 = vunpack.c.l.b16 %v1008
      %v1046 = vunpack.c.l.b16 %v1009
      %v1047 = vunpack.c.l.b16 %v1010
      %v1048 = vunpack.c.l.b16 %v1011
      %v1049 = vunpack.c.l.b16 %v1012
      %v1050 = vunpack.c.l.b16 %v1013
      %v1051 = vunpack.c.l.b16 %v1014
      %v1052 = vunpack.c.l.b16 %v1015
      %v1053 = vunpack.c.l.b16 %v1016
      %v1054 = vunpack.c.l.b16 %v1017
      %v1055 = vunpack.c.l.b16 %v1018
      %v1056 = vpack.c.b16 %v1041, %v1040
      %v1057 = vpack.c.b16 %v1043, %v1042
      %v1058 = vpack.c.b16 %v1045, %v1044
      %v1059 = vpack.c.b16 %v1047, %v1046
      %v1060 = vpack.c.b16 %v1049, %v1048
      %v1061 = vpack.c.b16 %v1051, %v1050
      %v1062 = vpack.c.b16 %v1053, %v1052
      %v1063 = vpack.c.b16 %v1055, %v1054
      %1072 = vmatprep.subr.bf16.mxu0 0
      %1073 = vmatpush1.bf16.msra.mxu0 %v1063
      %1074 = vmatprep.subr.bf16.mxu0 0
      %1075 = vmatpush1.bf16.msra.mxu0 %v1062
      %1076 = vmatprep.subr.bf16.mxu0 0
      %1077 = vmatpush1.bf16.msra.mxu0 %v1061
      %1078 = vmatprep.subr.bf16.mxu0 0
      %1079 = vmatpush1.bf16.msra.mxu0 %v1060
      %1080 = vmatprep.subr.bf16.mxu0 0
      %1081 = vmatpush1.bf16.msra.mxu0 %v1059
      %1082 = vmatprep.subr.bf16.mxu0 0
      %1083 = vmatpush1.bf16.msra.mxu0 %v1058
      %1084 = vmatprep.subr.bf16.mxu0 0
      %1085 = vmatpush1.bf16.msra.mxu0 %v1057
      %1086 = vmatprep.subr.bf16.mxu0 0
      %1087 = vmatpush1.bf16.msra.mxu0 %v1056
      %1088 = vmatprep.subr.bf16.mxu0 0
      %1089 = vmatpush2.bf16.msra.mxu0 0
      %1090 = vmatprep.subr.bf16.mxu0 0
      %1091 = vmatpush2.bf16.msra.mxu0 0
      %1092 = vmatprep.subr.bf16.mxu0 0
      %1093 = vmatpush2.bf16.msra.mxu0 0
      %1094 = vmatprep.subr.bf16.mxu0 0
      %1095 = vmatpush2.bf16.msra.mxu0 0
      %1096 = vmatprep.subr.bf16.mxu0 0
      %1097 = vmatpush2.bf16.msra.mxu0 0
      %1098 = vmatprep.subr.bf16.mxu0 0
      %1099 = vmatpush2.bf16.msra.mxu0 0
      %1100 = vmatprep.subr.bf16.mxu0 0
      %1101 = vmatpush2.bf16.msra.mxu0 0
      %1102 = vmatprep.subr.bf16.mxu0 0
      %1103 = vmatpush2.bf16.msra.mxu0 0
      %1104 = vmatprep.mubr.bf16.mxu0 0
      %1105 = vmatmul.mubr.bf16.gmra.mxu0 %v994
      %v1106 = vpop.f32.mrf.mxu0
      %v1107 = vadd.f32 %v1023, %v1106
      %v1108 = vpop.f32.mrf.mxu0
      %v1109 = vpop.f32.mrf.mxu0
      %v1110 = vadd.f32 %v1023, %v1109
      %v1111 = vpop.f32.mrf.mxu0
      %1112 = vmatprep.mubr.bf16.mxu0 0
      %1113 = vmatmul.mubr.bf16.gmra.mxu0 %v995
      %v1114 = vpop.f32.mrf.mxu0
      %v1115 = vadd.f32 %v1023, %v1114
      %v1116 = vpop.f32.mrf.mxu0
      %v1117 = vpop.f32.mrf.mxu0
      %v1118 = vadd.f32 %v1023, %v1117
      %v1119 = vpop.f32.mrf.mxu0
      %1120 = vmatprep.mubr.bf16.mxu0 0
      %1121 = vmatmul.mubr.bf16.gmra.mxu0 %v996
      %v1122 = vpop.f32.mrf.mxu0
      %v1123 = vadd.f32 %v1023, %v1122
      %v1124 = vpop.f32.mrf.mxu0
      %v1125 = vpop.f32.mrf.mxu0
      %v1126 = vadd.f32 %v1023, %v1125
      %v1127 = vpop.f32.mrf.mxu0
      %1128 = vmatprep.mubr.bf16.mxu0 0
      %1129 = vmatmul.mubr.bf16.gmra.mxu0 %v997
      %v1130 = vpop.f32.mrf.mxu0
      %v1131 = vadd.f32 %v1023, %v1130
      %v1132 = vpop.f32.mrf.mxu0
      %v1133 = vpop.f32.mrf.mxu0
      %v1134 = vadd.f32 %v1023, %v1133
      %v1135 = vpop.f32.mrf.mxu0
      %1136 = vmatprep.mubr.bf16.mxu0 0
      %1137 = vmatmul.mubr.bf16.gmra.mxu0 %v998
      %v1138 = vpop.f32.mrf.mxu0
      %v1139 = vadd.f32 %v1023, %v1138
      %v1140 = vpop.f32.mrf.mxu0
      %v1141 = vpop.f32.mrf.mxu0
      %v1142 = vadd.f32 %v1023, %v1141
      %v1143 = vpop.f32.mrf.mxu0
      %1144 = vmatprep.mubr.bf16.mxu0 0
      %1145 = vmatmul.mubr.bf16.gmra.mxu0 %v999
      %v1146 = vpop.f32.mrf.mxu0
      %v1147 = vadd.f32 %v1023, %v1146
      %v1148 = vpop.f32.mrf.mxu0
      %v1149 = vpop.f32.mrf.mxu0
      %v1150 = vadd.f32 %v1023, %v1149
      %v1151 = vpop.f32.mrf.mxu0
      %1152 = vmatprep.mubr.bf16.mxu0 0
      %1153 = vmatmul.mubr.bf16.gmra.mxu0 %v1000
      %v1154 = vpop.f32.mrf.mxu0
      %v1155 = vadd.f32 %v1023, %v1154
      %v1156 = vpop.f32.mrf.mxu0
      %v1157 = vpop.f32.mrf.mxu0
      %v1158 = vadd.f32 %v1023, %v1157
      %v1159 = vpop.f32.mrf.mxu0
      %1160 = vmatprep.mubr.bf16.mxu0 0
      %1161 = vmatmul.mubr.bf16.gmra.mxu0 %v1001
      %v1162 = vpop.f32.mrf.mxu0
      %v1163 = vadd.f32 %v1023, %v1162
      %v1164 = vpop.f32.mrf.mxu0
      %v1165 = vpop.f32.mrf.mxu0
      %v1166 = vadd.f32 %v1023, %v1165
      %v1167 = vpop.f32.mrf.mxu0
      %1168 = vdwg.mxu0
      %v1169 = vmax.f32 %v1107, 0.0
      %v1170 = vmax.f32 %v1110, 0.0
      %v1171 = vmax.f32 %v1115, 0.0
      %v1172 = vmax.f32 %v1118, 0.0
      %v1173 = vmax.f32 %v1123, 0.0
      %v1174 = vmax.f32 %v1126, 0.0
      %v1175 = vmax.f32 %v1131, 0.0
      %v1176 = vmax.f32 %v1134, 0.0
      %v1177 = vmax.f32 %v1139, 0.0
      %v1178 = vmax.f32 %v1142, 0.0
      %v1179 = vmax.f32 %v1147, 0.0
      %v1180 = vmax.f32 %v1150, 0.0
      %v1181 = vmax.f32 %v1155, 0.0
      %v1182 = vmax.f32 %v1158, 0.0
      %v1183 = vmax.f32 %v1163, 0.0
      %v1184 = vmax.f32 %v1166, 0.0
      %v1185 = vpack.c.bf16 %v1170, %v1169
      %v1186 = vpack.c.bf16 %v1172, %v1171
      %v1187 = vpack.c.bf16 %v1174, %v1173
      %v1188 = vpack.c.bf16 %v1176, %v1175
      %v1189 = vpack.c.bf16 %v1178, %v1177
      %v1190 = vpack.c.bf16 %v1180, %v1179
      %v1191 = vpack.c.bf16 %v1182, %v1181
      %v1192 = vpack.c.bf16 %v1184, %v1183
      %v1201 = vunpack.c.l.b16 %v1185
      %v1202 = vunpack.c.h.b16 %v1185
      %v1203 = vunpack.c.l.b16 %v1186
      %v1204 = vunpack.c.h.b16 %v1186
      %v1205 = vunpack.c.l.b16 %v1187
      %v1206 = vunpack.c.h.b16 %v1187
      %v1207 = vunpack.c.l.b16 %v1188
      %v1208 = vunpack.c.h.b16 %v1188
      %v1209 = vunpack.c.l.b16 %v1189
      %v1210 = vunpack.c.h.b16 %v1189
      %v1211 = vunpack.c.l.b16 %v1190
      %v1212 = vunpack.c.h.b16 %v1190
      %v1213 = vunpack.c.l.b16 %v1191
      %v1214 = vunpack.c.h.b16 %v1191
      %v1215 = vunpack.c.l.b16 %v1192
      %v1216 = vunpack.c.h.b16 %v1192
      %v1217 = vpack.c.b16 %v1201, %v1201
      %v1218 = vpack.c.b16 %v1202, %v1202
      %v1219 = vpack.c.b16 %v1203, %v1203
      %v1220 = vpack.c.b16 %v1204, %v1204
      %v1221 = vpack.c.b16 %v1205, %v1205
      %v1222 = vpack.c.b16 %v1206, %v1206
      %v1223 = vpack.c.b16 %v1207, %v1207
      %v1224 = vpack.c.b16 %v1208, %v1208
      %v1225 = vpack.c.b16 %v1209, %v1209
      %v1226 = vpack.c.b16 %v1210, %v1210
      %v1227 = vpack.c.b16 %v1211, %v1211
      %v1228 = vpack.c.b16 %v1212, %v1212
      %v1229 = vpack.c.b16 %v1213, %v1213
      %v1230 = vpack.c.b16 %v1214, %v1214
      %v1231 = vpack.c.b16 %v1215, %v1215
      %v1232 = vpack.c.b16 %v1216, %v1216
      %1249 = vst [vmem:[%s172] sm:$0xf] %v1217
      %1250 = vst [vmem:[%s172 + $0x4] sm:$0xf] %v1218
      %1251 = vst [vmem:[%s172 + $0x8] sm:$0xf] %v1219
      %1252 = vst [vmem:[%s172 + $0xc] sm:$0xf] %v1220
      %1253 = vst [vmem:[%s172 + $0x10] sm:$0xf] %v1221
      %1254 = vst [vmem:[%s172 + $0x14] sm:$0xf] %v1222
      %1255 = vst [vmem:[%s172 + $0x18] sm:$0xf] %v1223
      %1256 = vst [vmem:[%s172 + $0x1c] sm:$0xf] %v1224
      %1257 = vst [vmem:[%s172 + $0x20] sm:$0xf] %v1225
      %1258 = vst [vmem:[%s172 + $0x24] sm:$0xf] %v1226
      %1259 = vst [vmem:[%s172 + $0x28] sm:$0xf] %v1227
      %1260 = vst [vmem:[%s172 + $0x2c] sm:$0xf] %v1228
      %1261 = vst [vmem:[%s172 + $0x30] sm:$0xf] %v1229
      %1262 = vst [vmem:[%s172 + $0x34] sm:$0xf] %v1230
      %1263 = vst [vmem:[%s172 + $0x38] sm:$0xf] %v1231
      %1264 = vst [vmem:[%s172 + $0x3c] sm:$0xf] %v1232
      %s1265 = smul.u32 16, %s14
      %p1266 = scmp.lt.s32.totalorder %s1265, 31
      %s1267 = scalar_select %p1266, %s1265, 31
      %s1268 = smul.addr %s1267, 4
      %s1269 = scalar_lea.vmem %s3, %s1268
      // Predicated region
      $region33: #{generator_forward.1} parent=31 // pred_check
        %p1270 = pneg %p100
      $region34: #{generator_forward.1} parent=31 // pred_check_branch
        %1272 = sbr.rel (%p1270) target = $region36
      $region35: #{generator_forward.1} parent=31 // pred_region
        %s1273 = smul.u32 16, %s14
      $region36: #{generator_forward.1} parent=31 // pred_fallthru
        _
    $region32: #{generator_forward.1} parent=5 // pred_fallthru
      _
    %p1274 = scmp.le.s32.totalorder 2, %s9
    // Predicated region
    $region37: #{generator_forward.1} parent=5 // pred_check
      %p1275 = pneg %p1274
    $region38: #{generator_forward.1} parent=5 // pred_check_branch
      %1277 = sbr.rel (%p1275) target = $region40
    $region39: #{generator_forward.1} parent=5 // pred_region
      %s1278 = ssub.s32 %s9, 2
      // Predicated region
      $region41: #{generator_forward.1} parent=39 // pred_check
        %p1279 = pneg %p106
      $region42: #{generator_forward.1} parent=39 // pred_check_branch
        %1281 = sbr.rel (%p1279) target = $region44
      $region43: #{generator_forward.1} parent=39 // pred_region
        %s1282 = smul.u32 16, %s15
        %p1283 = scmp.lt.s32.totalorder %s1282, 31
        %s1284 = scalar_select %p1283, %s1282, 31
        %s1285 = smul.addr %s1284, 4
        %s1286 = scalar_lea.vmem %s3, %s1285
      $region44: #{generator_forward.1} parent=39 // pred_fallthru
        _
    $region40: #{generator_forward.1} parent=5 // pred_fallthru
      _
  $region6: #{generator_forward.1} parent=0 // loop_footer
    %s13 = sadd.s32 1, %s9
  $region7: #{generator_forward.1} parent=0 // loop_footer_branch
    %8 = sbr.rel target = $region3
  $region8: #{generator_forward.1} parent=0 // loop_exit
    _

</llo_original>
